<compile_context>
chip_gen: v7x
topology: tpu7x:2x2x1
jax: 0.10.0
libtpu: 0.0.40
codegen_flags: <defaults>
</compile_context>

<pallas_src>
import functools
import math

import jax
import jax.numpy as jnp
from jax.experimental import pallas as pl
from jax.experimental.pallas import tpu as pltpu

_LANE = 128
_VMEM_BUDGET = 20 * 1024 * 1024           # per-call block budget (safe on v7x 64 MiB)
_RESIDENT_SUPPORT_MAX = 8 * 1024 * 1024   # max VMEM-resident support (safe on all gens)
_VMEM_LIMIT_CAP = 48 * 1024 * 1024        # never request more than this scoped VMEM


def _round_up(x: int, m: int) -> int:
    return ((x + m - 1) // m) * m


def _dsize(dt) -> int:
    return jnp.dtype(dt).itemsize


def _vmem_limit(block_bytes: int) -> int:
    return int(min(_VMEM_LIMIT_CAP, max(32 * 1024 * 1024, 2 * block_bytes)))


def _pick_tile(total: int, desired: int) -> int:
    """Largest multiple of 128 that divides `total` (itself a multiple of 128)
    and is <= desired (falls back to 128)."""
    best = _LANE
    t = _LANE
    lim = min(desired, total)
    while t <= lim:
        if total % t == 0:
            best = t
        t += _LANE
    return best


def _pad_cast(x, rows, cols, dtype):
    r, c = x.shape
    if (r, c) == (rows, cols) and x.dtype == dtype:
        return x
    return jnp.zeros((rows, cols), dtype).at[:r, :c].set(x.astype(dtype))


# ---------------------------------------------------------------------------
# Pass: dense row-tiled matmul against a small VMEM-resident weight
#   (used for features @ weight, or (adj@features) @ weight when switched)
# ---------------------------------------------------------------------------
def _transform_kernel(x_ref, w_ref, o_ref, *, active):
    acc = jnp.dot(x_ref[...].astype(w_ref.dtype), w_ref[...],
                  preferred_element_type=jnp.float32)
    if active:
        acc = jnp.maximum(acc, 0.0)
    o_ref[...] = acc.astype(o_ref.dtype)


def _feature_transform(x, w, *, tm, out_dtype, active):
    n, k = x.shape
    _, m = w.shape
    xb, wb, ob = _dsize(x.dtype), _dsize(w.dtype), _dsize(out_dtype)

    # Shrink the row tile until double-buffered blocks fit the VMEM budget.
    def est(t):
        return 2 * t * k * xb + k * m * wb + 2 * t * m * ob

    while est(tm) > _VMEM_BUDGET and tm > _LANE:
        tm = _pick_tile(n, tm // 2)
    # TODO(synk): if fin_p/fout_p are huge the resident weight alone can exceed
    # the budget; a K-tiled fallback over in_features would be needed then.

    cost = pl.CostEstimate(
        flops=2 * n * k * m, transcendentals=0,
        bytes_accessed=n * k * xb + k * m * wb + n * m * ob)

    return pl.pallas_call(
        functools.partial(_transform_kernel, active=active),
        out_shape=jax.ShapeDtypeStruct((n, m), out_dtype),
        grid_spec=pltpu.PrefetchScalarGridSpec(
            num_scalar_prefetch=0,
            grid=(n // tm,),
            in_specs=[
                pl.BlockSpec((tm, k), lambda i: (i, 0)),   # streamed row tile
                pl.BlockSpec((k, m), lambda i: (0, 0)),    # VMEM-resident weight
            ],
            out_specs=pl.BlockSpec((tm, m), lambda i: (i, 0)),
        ),
        compiler_params=pltpu.CompilerParams(
            dimension_semantics=("parallel",),
            vmem_limit_bytes=_vmem_limit(est(tm))),
        cost_estimate=cost,
    )(x, w)


# ---------------------------------------------------------------------------
# Pass: aggregation  out = relu?(adj @ s)
#   fused mode : s fully VMEM-resident, no K grid axis (no s re-reads)
#   tiled mode : K-tiled, f32 accumulator-in-output, ReLU fused into last step
# ---------------------------------------------------------------------------
def _agg_fused_kernel(a_ref, s_ref, o_ref, *, active):
    acc = jnp.dot(a_ref[...].astype(s_ref.dtype), s_ref[...],
                  preferred_element_type=jnp.float32)
    if active:
        acc = jnp.maximum(acc, 0.0)
    o_ref[...] = acc.astype(o_ref.dtype)


def _agg_tiled_kernel(a_ref, s_ref, o_ref, *, active):
    k = pl.program_id(1)
    partial = jnp.dot(a_ref[...].astype(s_ref.dtype), s_ref[...],
                      preferred_element_type=jnp.float32)

    @pl.when(k == 0)
    def _():
        o_ref[...] = jnp.zeros_like(o_ref)

    is_last = k == pl.num_programs(1) - 1

    @pl.when(jnp.logical_not(is_last))
    def _():
        o_ref[...] = o_ref[...] + partial

    @pl.when(is_last)
    def _():
        acc = o_ref[...] + partial          # fused add + ReLU: one output sweep
        if active:
            acc = jnp.maximum(acc, 0.0)
        o_ref[...] = acc


def _aggregate(adj, s, *, tn, tk, out_dtype, active, force_tiled=False):
    n = adj.shape[0]
    m = s.shape[1]
    ab, sb = _dsize(adj.dtype), _dsize(s.dtype)
    support_bytes = n * m * sb

    # ---- fused path: whole `s` VMEM-resident, single grid axis -------------
    tn_f = tn

    def fused_est(t):
        return support_bytes + 2 * t * n * ab + 2 * t * m * _dsize(out_dtype)

    while fused_est(tn_f) > _VMEM_BUDGET and tn_f > _LANE:
        tn_f = _pick_tile(n, tn_f // 2)

    use_fused = (not force_tiled
                 and support_bytes <= _RESIDENT_SUPPORT_MAX
                 and fused_est(tn_f) <= _VMEM_BUDGET)

    if use_fused:
        cost = pl.CostEstimate(
            flops=2 * n * n * m, transcendentals=0,
            bytes_accessed=n * n * ab + support_bytes
            + n * m * _dsize(out_dtype))
        return pl.pallas_call(
            functools.partial(_agg_fused_kernel, active=active),
            out_shape=jax.ShapeDtypeStruct((n, m), out_dtype),
            grid_spec=pltpu.PrefetchScalarGridSpec(
                num_scalar_prefetch=0,
                grid=(n // tn_f,),
                in_specs=[
                    pl.BlockSpec((tn_f, n), lambda i: (i, 0)),  # adj row stripe
                    pl.BlockSpec((n, m), lambda i: (0, 0)),     # resident support
                ],
                out_specs=pl.BlockSpec((tn_f, m), lambda i: (i, 0)),
            ),
            compiler_params=pltpu.CompilerParams(
                dimension_semantics=("parallel",),
                vmem_limit_bytes=_vmem_limit(fused_est(tn_f))),
            cost_estimate=cost,
        )(adj, s)

    # ---- tiled path (large N): accumulation always in an f32 output --------
    def tiled_est(t_n, t_k):
        return 2 * t_n * t_k * ab + 2 * t_k * m * sb + 2 * t_n * m * 4

    while tiled_est(tn, tk) > _VMEM_BUDGET and tn > _LANE:
        tn = _pick_tile(n, tn // 2)
    while tiled_est(tn, tk) > _VMEM_BUDGET and tk > _LANE:
        tk = _pick_tile(n, tk // 2)

    cost = pl.CostEstimate(
        flops=2 * n * n * m, transcendentals=0,
        bytes_accessed=n * n * ab + (n // tn) * n * m * sb + n * m * 4)
    return pl.pallas_call(
        functools.partial(_agg_tiled_kernel, active=active),
        out_shape=jax.ShapeDtypeStruct((n, m), jnp.float32),
        grid_spec=pltpu.PrefetchScalarGridSpec(
            num_scalar_prefetch=0,
            grid=(n // tn, n // tk),
            in_specs=[
                pl.BlockSpec((tn, tk), lambda i, k: (i, k)),   # adj tile
                pl.BlockSpec((tk, m), lambda i, k: (k, 0)),    # s K tile
            ],
            out_specs=pl.BlockSpec((tn, m), lambda i, k: (i, 0)),
        ),
        compiler_params=pltpu.CompilerParams(
            dimension_semantics=("parallel", "arbitrary"),
            vmem_limit_bytes=_vmem_limit(tiled_est(tn, tk))),
        cost_estimate=cost,
    )(adj, s)


# ---------------------------------------------------------------------------
# Top-level wrapper
# ---------------------------------------------------------------------------
def gnn_layer(features, adj, weight, *, active=True, tn_rows=512, tk_nodes=512,
              use_bf16_matmul=True, force_tiled_aggregate=False):
    """Pallas forward for GNNLayer: relu_if_active(adj @ (features @ weight)).

    features: [N, in_features] float32
    adj:      [N, N] float32 (dense stand-in for the sparse adjacency)
    weight:   [in_features, out_features] float32
    """
    n, fin = features.shape
    assert adj.shape == (n, n)
    fin_w, fout = weight.shape
    assert fin_w == fin

    mm_dtype = jnp.bfloat16 if use_bf16_matmul else jnp.float32
    n_p = _round_up(n, _LANE)
    fin_p = _round_up(fin, _LANE)
    fout_p = _round_up(fout, _LANE)

    # Row tile: prefer large, but keep >=2 tiles so both v7x TensorCores work.
    tn = _pick_tile(n_p, tn_rows)
    if tn == n_p and n_p >= 2 * _LANE:
        tn = _pick_tile(n_p, n_p // 2)
    tk = _pick_tile(n_p, tk_nodes)

    # Small operands: pad + cast (negligible traffic).
    feats_p = _pad_cast(features, n_p, fin_p, mm_dtype)
    w_p = _pad_cast(weight, fin_p, fout_p, mm_dtype)

    # Dominant operand: never copy when already aligned; tiles are cast to the
    # MXU dtype inside the kernel, avoiding an extra O(N^2) HBM pass.
    if n == n_p:
        adj_w = adj
    else:
        # TODO(synk): a ragged last row/col tile would avoid this one-off
        # O(N^2) pad copy; only taken when N is not a multiple of 128.
        adj_w = _pad_cast(adj, n_p, n_p, mm_dtype)

    if fout_p <= fin_p:
        # Standard order: post-adj feature width is the (smaller) fout_p.
        support = _feature_transform(feats_p, w_p, tm=tn, out_dtype=mm_dtype,
                                     active=False)
        out = _aggregate(adj_w, support, tn=tn, tk=tk, out_dtype=jnp.float32,
                         active=active, force_tiled=force_tiled_aggregate)
    else:
        # Expanding layer: (adj @ features) @ weight keeps the N x N matmul on
        # the narrower feature width and the intermediate at N x fin_p.
        h = _aggregate(adj_w, feats_p, tn=tn, tk=tk, out_dtype=mm_dtype,
                       active=False, force_tiled=force_tiled_aggregate)
        out = _feature_transform(h, w_p, tm=tn, out_dtype=jnp.float32,
                                 active=active)
    return out[:n, :fout]


def _reference(features, adj, weight, *, active):
    out = adj @ (features @ weight)
    if active:
        out = jnp.maximum(out, 0.0)
    return out


if __name__ == "__main__":
    key = jax.random.PRNGKey(0)
    k_feat, k_adj, k_w, k_w2 = jax.random.split(key, 4)

    def make_inputs(n_nodes, in_features, out_features, kf, ka, kw):
        features = jax.random.normal(kf, (n_nodes, in_features), jnp.float32)
        # Deterministic xavier_uniform_-style init, like the torch module.
        bound = math.sqrt(6.0 / (in_features + out_features))
        weight = jax.random.uniform(kw, (in_features, out_features),
                                    jnp.float32, minval=-bound, maxval=bound)
        # Dense row-normalized random adjacency with self loops (stands in for
        # the sparse adj passed to torch.spmm).
        a = (jax.random.uniform(ka, (n_nodes, n_nodes)) < 0.1).astype(jnp.float32)
        a = a + jnp.eye(n_nodes, dtype=jnp.float32)
        adj = a / jnp.sum(a, axis=1, keepdims=True)
        return features, adj, weight

    # --- case 1: aligned N, default bf16 path (VMEM-resident support) -------
    f1, a1, w1 = make_inputs(128, 64, 32, k_feat, k_adj, k_w)
    out = gnn_layer(f1, a1, w1, active=True)
    jax.block_until_ready(out)
    ref = _reference(f1, a1, w1, active=True)
    assert out.shape == ref.shape
    assert jnp.allclose(out, ref, atol=3e-2, rtol=3e-2), "bf16 path mismatch"

    # active=False, f32 MXU path (tight tolerance)
    out32 = gnn_layer(f1, a1, w1, active=False, use_bf16_matmul=False)
    jax.block_until_ready(out32)
    ref32 = _reference(f1, a1, w1, active=False)
    assert jnp.allclose(out32, ref32, atol=1e-4, rtol=1e-4), "f32 path mismatch"

    # --- case 2: unaligned N, forced K-tiled aggregation path, f32 ----------
    f2, a2, w2 = make_inputs(200, 48, 96, k_feat, k_adj, k_w2)
    out2 = gnn_layer(f2, a2, w2, active=True, use_bf16_matmul=False,
                     tk_nodes=128, force_tiled_aggregate=True)
    jax.block_until_ready(out2)
    ref2 = _reference(f2, a2, w2, active=True)
    assert out2.shape == ref2.shape
    assert jnp.allclose(out2, ref2, atol=1e-4, rtol=1e-4), "tiled path mismatch"

    # --- case 3: expanding layer (fout > fin) -> associativity switch -------
    f3, a3, w3 = make_inputs(128, 64, 256, k_feat, k_adj, k_w2)
    out3 = gnn_layer(f3, a3, w3, active=True)
    jax.block_until_ready(out3)
    ref3 = _reference(f3, a3, w3, active=True)
    assert out3.shape == ref3.shape
    assert jnp.allclose(out3, ref3, atol=3e-2, rtol=3e-2), "expanding path mismatch"

    print("KERNEL_OK")
</pallas_src>

<mosaic_0001>
module attributes {stable_mosaic.version = 11 : i64} {
  func.func @_transform_kernel(%arg0: i32, %arg1: memref<128x128xbf16, #tpu.memory_space<vmem>>, %arg2: memref<128x128xbf16, #tpu.memory_space<vmem>>, %arg3: memref<128x128xbf16, #tpu.memory_space<vmem>>) attributes {dimension_semantics = [#tpu.dimension_semantics<parallel>], iteration_bounds = array<i64: 1>, scalar_prefetch = 0 : i64, scratch_operands = 0 : i64, tpu.core_type = #tpu.core_type<tc>, window_params = [{transform_indices = @transform_0, window_bounds = array<i64: 128, 128>}, {pipeline_mode = #tpu.pipeline_mode<synchronous>, transform_indices = @transform_1, window_bounds = array<i64: 128, 128>}, {transform_indices = @transform_2, window_bounds = array<i64: 128, 128>}]} {
    %c0 = arith.constant 0 : index
    %c0_0 = arith.constant 0 : index
    %0 = vector.load %arg1[%c0, %c0_0] : memref<128x128xbf16, #tpu.memory_space<vmem>>, vector<128x128xbf16>
    %c0_1 = arith.constant 0 : index
    %c0_2 = arith.constant 0 : index
    %1 = vector.load %arg2[%c0_1, %c0_2] : memref<128x128xbf16, #tpu.memory_space<vmem>>, vector<128x128xbf16>
    %cst = arith.constant dense<0.000000e+00> : vector<128x128xf32>
    %2 = tpu.matmul %0, %1, %cst {dimension_numbers = #tpu.dot_dimension_numbers<[1], [0], [0], [1], [0, 0, 1, 1], [], []>} : vector<128x128xbf16>, vector<128x128xbf16>, vector<128x128xf32> -> vector<128x128xf32>
    %3 = arith.truncf %2 : vector<128x128xf32> to vector<128x128xbf16>
    %c0_3 = arith.constant 0 : index
    %c0_4 = arith.constant 0 : index
    %4 = vector.load %arg3[%c0_3, %c0_4] : memref<128x128xbf16, #tpu.memory_space<vmem>>, vector<128x128xbf16>
    tpu.vector_store %arg3[%c0_3, %c0_4], %3 {strides = array<i32>} : memref<128x128xbf16, #tpu.memory_space<vmem>>, vector<128x128xbf16>,
    return
  }
  func.func @transform_0(%arg0: i32) -> (i32, i32) {
    %c0_i32 = arith.constant 0 : i32
    %c0_i32_0 = arith.constant 0 : i32
    return %arg0, %c0_i32 : i32, i32
  }
  func.func @transform_1(%arg0: i32) -> (i32, i32) {
    %c0_i32 = arith.constant 0 : i32
    %c0_i32_0 = arith.constant 0 : i32
    %c0_i32_1 = arith.constant 0 : i32
    return %c0_i32, %c0_i32_0 : i32, i32
  }
  func.func @transform_2(%arg0: i32) -> (i32, i32) {
    %c0_i32 = arith.constant 0 : i32
    %c0_i32_0 = arith.constant 0 : i32
    return %arg0, %c0_i32 : i32, i32
  }
}

</mosaic_0001>

<llo_original>
// kernel: tpu_custom_call.1
$region0: #{tpu_custom_call.1}
  #allocation0 [shape = 'u32[]', space=smem, size = 0x4, offset = 0x4, fixed_abs, tag = 'smem constant byte address 0x4 - core index']
  #allocation1 [shape = 'u32[144,128]{1,0:T(1,128)}', space=vmem, size = 0x12000, scoped, tag = 'internal scratch']
  %s0 = inlined_call_operand.hbm [shape: bf16[128,128], index: 0, kind: input, shape index: {}]
  %s1 = inlined_call_operand.hbm [shape: bf16[128,128], index: 1, kind: input, shape index: {}]
  %s2 = inlined_call_operand.hbm [shape: bf16[128,128], index: 2, kind: output, shape index: {}]
  %s3 = sld [smem:[#allocation0]]
  $region26: #{tpu_custom_call.1} parent=0
    _
  %s5 = ssub.s32 1, %s3
  %s6 = scalar_select 0, %s5, %s3
  $region1: #{tpu_custom_call.1} parent=0
    #allocation2 [shape = 'u8[32768]{0}', space=vmem, size = 0x8000, scoped, tag = 'input window, operand 0, single buffered']
    #allocation3 [shape = 's32[1]{0}', space=sflag, size = 0x4, scoped, tag = 'scoped memory for tpu_custom_call.1']
    #allocation4 [shape = 's32[1]{0}', space=sflag, size = 0x4, scoped, tag = 'scoped memory for tpu_custom_call.1']
    #allocation5 [shape = 'u8[32768]{0}', space=vmem, size = 0x8000, scoped, tag = 'input window, operand 1, single buffered']
    #allocation6 [shape = 's32[1]{0}', space=sflag, size = 0x4, scoped, tag = 'scoped memory for tpu_custom_call.1']
    #allocation7 [shape = 'u8[32768]{0}', space=vmem, size = 0x8000, scoped, tag = 'output window, operand 0, single buffered']
    %7 = vsyncpa [#allocation3], 0
    %8 = vsyncpa [#allocation6], 0
    %9 = vsyncpa [#allocation4], 0
    // Predicated region
    $region2: #{tpu_custom_call.1} parent=1 // pred_check
      _
    $region3: #{tpu_custom_call.1} parent=1 // pred_check_branch
      %11 = sbr.rel (0) target = $region5
    $region4: #{tpu_custom_call.1} parent=1 // pred_region
      %s13 = ssub.s32 1024, 1024
      %14 = vsyncadd [#allocation3], %s13
      %s15 = sshll.u32 [#allocation2], 4
      %s16 = int_to_ptr.vmem [resolvable:$true] %s15
      %21 = dma.hbm_to_vmem [thread:$0]  %s0, 1024, %s16, [#allocation3], 64, 64, 4
    $region5: #{tpu_custom_call.1} parent=1 // pred_fallthru
      _
    // Predicated region
    $region6: #{tpu_custom_call.1} parent=1 // pred_check
      _
    $region7: #{tpu_custom_call.1} parent=1 // pred_check_branch
      %23 = sbr.rel (0) target = $region9
    $region8: #{tpu_custom_call.1} parent=1 // pred_region
      %s25 = ssub.s32 1024, 1024
      %26 = vsyncadd [#allocation6], %s25
      %s27 = sshll.u32 [#allocation5], 4
      %s28 = int_to_ptr.vmem [resolvable:$true] %s27
      %33 = dma.hbm_to_vmem [thread:$0]  %s1, 1024, %s28, [#allocation6], 64, 64, 4
    $region9: #{tpu_custom_call.1} parent=1 // pred_fallthru
      _
    // Predicated region
    $region10: #{tpu_custom_call.1} parent=1 // pred_check
      _
    $region11: #{tpu_custom_call.1} parent=1 // pred_check_branch
      %35 = sbr.rel (0) target = $region13
    $region12: #{tpu_custom_call.1} parent=1 // pred_region
      %36 = dma.done [#allocation3], 1024
    $region13: #{tpu_custom_call.1} parent=1 // pred_fallthru
      _
    // Predicated region
    $region14: #{tpu_custom_call.1} parent=1 // pred_check
      _
    $region15: #{tpu_custom_call.1} parent=1 // pred_check_branch
      %38 = sbr.rel (0) target = $region17
    $region16: #{tpu_custom_call.1} parent=1 // pred_region
      %39 = dma.done [#allocation6], 1024
    $region17: #{tpu_custom_call.1} parent=1 // pred_fallthru
      _
    %v41 = vld [vmem:[#allocation2] sm:$0xf]
    %v42 = vld [vmem:[#allocation2 + $0x4] sm:$0xf]
    %v43 = vld [vmem:[#allocation2 + $0x8] sm:$0xf]
    %v44 = vld [vmem:[#allocation2 + $0xc] sm:$0xf]
    %v45 = vld [vmem:[#allocation2 + $0x10] sm:$0xf]
    %v46 = vld [vmem:[#allocation2 + $0x14] sm:$0xf]
    %v47 = vld [vmem:[#allocation2 + $0x18] sm:$0xf]
    %v48 = vld [vmem:[#allocation2 + $0x1c] sm:$0xf]
    %v49 = vld [vmem:[#allocation2 + $0x20] sm:$0xf]
    %v50 = vld [vmem:[#allocation2 + $0x24] sm:$0xf]
    %v51 = vld [vmem:[#allocation2 + $0x28] sm:$0xf]
    %v52 = vld [vmem:[#allocation2 + $0x2c] sm:$0xf]
    %v53 = vld [vmem:[#allocation2 + $0x30] sm:$0xf]
    %v54 = vld [vmem:[#allocation2 + $0x34] sm:$0xf]
    %v55 = vld [vmem:[#allocation2 + $0x38] sm:$0xf]
    %v56 = vld [vmem:[#allocation2 + $0x3c] sm:$0xf]
    %v57 = vld [vmem:[#allocation5] sm:$0xf]
    %v58 = vld [vmem:[#allocation5 + $0x4] sm:$0xf]
    %v59 = vld [vmem:[#allocation5 + $0x8] sm:$0xf]
    %v60 = vld [vmem:[#allocation5 + $0xc] sm:$0xf]
    %v61 = vld [vmem:[#allocation5 + $0x10] sm:$0xf]
    %v62 = vld [vmem:[#allocation5 + $0x14] sm:$0xf]
    %v63 = vld [vmem:[#allocation5 + $0x18] sm:$0xf]
    %v64 = vld [vmem:[#allocation5 + $0x1c] sm:$0xf]
    %v65 = vld [vmem:[#allocation5 + $0x20] sm:$0xf]
    %v66 = vld [vmem:[#allocation5 + $0x24] sm:$0xf]
    %v67 = vld [vmem:[#allocation5 + $0x28] sm:$0xf]
    %v68 = vld [vmem:[#allocation5 + $0x2c] sm:$0xf]
    %v69 = vld [vmem:[#allocation5 + $0x30] sm:$0xf]
    %v70 = vld [vmem:[#allocation5 + $0x34] sm:$0xf]
    %v71 = vld [vmem:[#allocation5 + $0x38] sm:$0xf]
    %v72 = vld [vmem:[#allocation5 + $0x3c] sm:$0xf]
    %v89 = vunpack.c.l.b16 %v41
    %v90 = vunpack.c.l.b16 %v42
    %v91 = vunpack.c.l.b16 %v43
    %v92 = vunpack.c.l.b16 %v44
    %v93 = vunpack.c.l.b16 %v45
    %v94 = vunpack.c.l.b16 %v46
    %v95 = vunpack.c.l.b16 %v47
    %v96 = vunpack.c.l.b16 %v48
    %v97 = vunpack.c.l.b16 %v49
    %v98 = vunpack.c.l.b16 %v50
    %v99 = vunpack.c.l.b16 %v51
    %v100 = vunpack.c.l.b16 %v52
    %v101 = vunpack.c.l.b16 %v53
    %v102 = vunpack.c.l.b16 %v54
    %v103 = vunpack.c.l.b16 %v55
    %v104 = vunpack.c.l.b16 %v56
    %v105 = vpack.c.b16 %v90, %v89
    %v106 = vpack.c.b16 %v92, %v91
    %v107 = vpack.c.b16 %v94, %v93
    %v108 = vpack.c.b16 %v96, %v95
    %v109 = vpack.c.b16 %v98, %v97
    %v110 = vpack.c.b16 %v100, %v99
    %v111 = vpack.c.b16 %v102, %v101
    %v112 = vpack.c.b16 %v104, %v103
    %v137 = vunpack.c.l.b16 %v57
    %v138 = vunpack.c.l.b16 %v58
    %v139 = vunpack.c.l.b16 %v59
    %v140 = vunpack.c.l.b16 %v60
    %v141 = vunpack.c.l.b16 %v61
    %v142 = vunpack.c.l.b16 %v62
    %v143 = vunpack.c.l.b16 %v63
    %v144 = vunpack.c.l.b16 %v64
    %v145 = vunpack.c.l.b16 %v65
    %v146 = vunpack.c.l.b16 %v66
    %v147 = vunpack.c.l.b16 %v67
    %v148 = vunpack.c.l.b16 %v68
    %v149 = vunpack.c.l.b16 %v69
    %v150 = vunpack.c.l.b16 %v70
    %v151 = vunpack.c.l.b16 %v71
    %v152 = vunpack.c.l.b16 %v72
    %v153 = vpack.c.b16 %v138, %v137
    %v154 = vpack.c.b16 %v140, %v139
    %v155 = vpack.c.b16 %v142, %v141
    %v156 = vpack.c.b16 %v144, %v143
    %v157 = vpack.c.b16 %v146, %v145
    %v158 = vpack.c.b16 %v148, %v147
    %v159 = vpack.c.b16 %v150, %v149
    %v160 = vpack.c.b16 %v152, %v151
    %169 = vmatprep.subr.bf16.mxu0 0
    %170 = vmatpush1.bf16.msra.mxu0 %v153
    %171 = vmatprep.subr.bf16.mxu0 0
    %172 = vmatpush1.bf16.msra.mxu0 %v154
    %173 = vmatprep.subr.bf16.mxu0 0
    %174 = vmatpush1.bf16.msra.mxu0 %v155
    %175 = vmatprep.subr.bf16.mxu0 0
    %176 = vmatpush1.bf16.msra.mxu0 %v156
    %177 = vmatprep.subr.bf16.mxu0 0
    %178 = vmatpush1.bf16.msra.mxu0 %v157
    %179 = vmatprep.subr.bf16.mxu0 0
    %180 = vmatpush1.bf16.msra.mxu0 %v158
    %181 = vmatprep.subr.bf16.mxu0 0
    %182 = vmatpush1.bf16.msra.mxu0 %v159
    %183 = vmatprep.subr.bf16.mxu0 0
    %184 = vmatpush1.bf16.msra.mxu0 %v160
    %185 = vmatprep.subr.bf16.mxu0 0
    %186 = vmatpush1.bf16.msra.mxu0 0
    %187 = vmatprep.subr.bf16.mxu0 0
    %188 = vmatpush1.bf16.msra.mxu0 0
    %189 = vmatprep.subr.bf16.mxu0 0
    %190 = vmatpush1.bf16.msra.mxu0 0
    %191 = vmatprep.subr.bf16.mxu0 0
    %192 = vmatpush1.bf16.msra.mxu0 0
    %193 = vmatprep.subr.bf16.mxu0 0
    %194 = vmatpush1.bf16.msra.mxu0 0
    %195 = vmatprep.subr.bf16.mxu0 0
    %196 = vmatpush1.bf16.msra.mxu0 0
    %197 = vmatprep.subr.bf16.mxu0 0
    %198 = vmatpush1.bf16.msra.mxu0 0
    %199 = vmatprep.subr.bf16.mxu0 0
    %200 = vmatpush1.bf16.msra.mxu0 0
    %201 = vmatprep.mubr.bf16.mxu0 0
    %202 = vmatmul.mubr.bf16.gmra.mrb[0].mxu0 %v105
    %v203 = vpop.f32.mrb[0].mxu0
    %v204 = vadd.f32 0.0, %v203
    %v205 = vpop.f32.mrb[0].mxu0
    %v206 = vpop.f32.mrb[0].mxu0
    %v207 = vadd.f32 0.0, %v206
    %v208 = vpop.f32.mrb[0].mxu0
    %209 = vmatprep.mubr.bf16.mxu0 0
    %210 = vmatmul.mubr.bf16.gmra.mrb[0].mxu0 %v106
    %v211 = vpop.f32.mrb[0].mxu0
    %v212 = vadd.f32 0.0, %v211
    %v213 = vpop.f32.mrb[0].mxu0
    %v214 = vpop.f32.mrb[0].mxu0
    %v215 = vadd.f32 0.0, %v214
    %v216 = vpop.f32.mrb[0].mxu0
    %217 = vmatprep.mubr.bf16.mxu0 0
    %218 = vmatmul.mubr.bf16.gmra.mrb[0].mxu0 %v107
    %v219 = vpop.f32.mrb[0].mxu0
    %v220 = vadd.f32 0.0, %v219
    %v221 = vpop.f32.mrb[0].mxu0
    %v222 = vpop.f32.mrb[0].mxu0
    %v223 = vadd.f32 0.0, %v222
    %v224 = vpop.f32.mrb[0].mxu0
    %225 = vmatprep.mubr.bf16.mxu0 0
    %226 = vmatmul.mubr.bf16.gmra.mrb[0].mxu0 %v108
    %v227 = vpop.f32.mrb[0].mxu0
    %v228 = vadd.f32 0.0, %v227
    %v229 = vpop.f32.mrb[0].mxu0
    %v230 = vpop.f32.mrb[0].mxu0
    %v231 = vadd.f32 0.0, %v230
    %v232 = vpop.f32.mrb[0].mxu0
    %233 = vmatprep.mubr.bf16.mxu0 0
    %234 = vmatmul.mubr.bf16.gmra.mrb[0].mxu0 %v109
    %v235 = vpop.f32.mrb[0].mxu0
    %v236 = vadd.f32 0.0, %v235
    %v237 = vpop.f32.mrb[0].mxu0
    %v238 = vpop.f32.mrb[0].mxu0
    %v239 = vadd.f32 0.0, %v238
    %v240 = vpop.f32.mrb[0].mxu0
    %241 = vmatprep.mubr.bf16.mxu0 0
    %242 = vmatmul.mubr.bf16.gmra.mrb[0].mxu0 %v110
    %v243 = vpop.f32.mrb[0].mxu0
    %v244 = vadd.f32 0.0, %v243
    %v245 = vpop.f32.mrb[0].mxu0
    %v246 = vpop.f32.mrb[0].mxu0
    %v247 = vadd.f32 0.0, %v246
    %v248 = vpop.f32.mrb[0].mxu0
    %249 = vmatprep.mubr.bf16.mxu0 0
    %250 = vmatmul.mubr.bf16.gmra.mrb[0].mxu0 %v111
    %v251 = vpop.f32.mrb[0].mxu0
    %v252 = vadd.f32 0.0, %v251
    %v253 = vpop.f32.mrb[0].mxu0
    %v254 = vpop.f32.mrb[0].mxu0
    %v255 = vadd.f32 0.0, %v254
    %v256 = vpop.f32.mrb[0].mxu0
    %257 = vmatprep.mubr.bf16.mxu0 0
    %258 = vmatmul.mubr.bf16.gmra.mrb[0].mxu0 %v112
    %v259 = vpop.f32.mrb[0].mxu0
    %v260 = vadd.f32 0.0, %v259
    %v261 = vpop.f32.mrb[0].mxu0
    %v262 = vpop.f32.mrb[0].mxu0
    %v263 = vadd.f32 0.0, %v262
    %v264 = vpop.f32.mrb[0].mxu0
    %265 = vdwg.mxu0
    %v266 = vpack.c.bf16 %v207, %v204
    %v267 = vpack.c.bf16 %v215, %v212
    %v268 = vpack.c.bf16 %v223, %v220
    %v269 = vpack.c.bf16 %v231, %v228
    %v270 = vpack.c.bf16 %v239, %v236
    %v271 = vpack.c.bf16 %v247, %v244
    %v272 = vpack.c.bf16 %v255, %v252
    %v273 = vpack.c.bf16 %v263, %v260
    %v282 = vunpack.c.l.b16 %v266
    %v283 = vunpack.c.h.b16 %v266
    %v284 = vunpack.c.l.b16 %v267
    %v285 = vunpack.c.h.b16 %v267
    %v286 = vunpack.c.l.b16 %v268
    %v287 = vunpack.c.h.b16 %v268
    %v288 = vunpack.c.l.b16 %v269
    %v289 = vunpack.c.h.b16 %v269
    %v290 = vunpack.c.l.b16 %v270
    %v291 = vunpack.c.h.b16 %v270
    %v292 = vunpack.c.l.b16 %v271
    %v293 = vunpack.c.h.b16 %v271
    %v294 = vunpack.c.l.b16 %v272
    %v295 = vunpack.c.h.b16 %v272
    %v296 = vunpack.c.l.b16 %v273
    %v297 = vunpack.c.h.b16 %v273
    %v298 = vpack.c.b16 %v282, %v282
    %v299 = vpack.c.b16 %v283, %v283
    %v300 = vpack.c.b16 %v284, %v284
    %v301 = vpack.c.b16 %v285, %v285
    %v302 = vpack.c.b16 %v286, %v286
    %v303 = vpack.c.b16 %v287, %v287
    %v304 = vpack.c.b16 %v288, %v288
    %v305 = vpack.c.b16 %v289, %v289
    %v306 = vpack.c.b16 %v290, %v290
    %v307 = vpack.c.b16 %v291, %v291
    %v308 = vpack.c.b16 %v292, %v292
    %v309 = vpack.c.b16 %v293, %v293
    %v310 = vpack.c.b16 %v294, %v294
    %v311 = vpack.c.b16 %v295, %v295
    %v312 = vpack.c.b16 %v296, %v296
    %v313 = vpack.c.b16 %v297, %v297
    %330 = vst [vmem:[#allocation7] sm:$0xf] %v298
    %331 = vst [vmem:[#allocation7 + $0x4] sm:$0xf] %v299
    %332 = vst [vmem:[#allocation7 + $0x8] sm:$0xf] %v300
    %333 = vst [vmem:[#allocation7 + $0xc] sm:$0xf] %v301
    %334 = vst [vmem:[#allocation7 + $0x10] sm:$0xf] %v302
    %335 = vst [vmem:[#allocation7 + $0x14] sm:$0xf] %v303
    %336 = vst [vmem:[#allocation7 + $0x18] sm:$0xf] %v304
    %337 = vst [vmem:[#allocation7 + $0x1c] sm:$0xf] %v305
    %338 = vst [vmem:[#allocation7 + $0x20] sm:$0xf] %v306
    %339 = vst [vmem:[#allocation7 + $0x24] sm:$0xf] %v307
    %340 = vst [vmem:[#allocation7 + $0x28] sm:$0xf] %v308
    %341 = vst [vmem:[#allocation7 + $0x2c] sm:$0xf] %v309
    %342 = vst [vmem:[#allocation7 + $0x30] sm:$0xf] %v310
    %343 = vst [vmem:[#allocation7 + $0x34] sm:$0xf] %v311
    %344 = vst [vmem:[#allocation7 + $0x38] sm:$0xf] %v312
    %345 = vst [vmem:[#allocation7 + $0x3c] sm:$0xf] %v313
    // Predicated region
    $region18: #{tpu_custom_call.1} parent=1 // pred_check
      _
    $region19: #{tpu_custom_call.1} parent=1 // pred_check_branch
      %347 = sbr.rel (0) target = $region21
    $region20: #{tpu_custom_call.1} parent=1 // pred_region
      %s349 = ssub.s32 1024, 1024
      %350 = vsyncadd [#allocation4], %s349
      %s351 = sshll.u32 [#allocation7], 4
      %s352 = int_to_ptr.vmem [resolvable:$true] %s351
      %357 = dma.vmem_to_hbm [thread:$0]  %s352, 1024, %s2, [#allocation4], 64, 64, 4
    $region21: #{tpu_custom_call.1} parent=1 // pred_fallthru
      _
    // Predicated region
    $region22: #{tpu_custom_call.1} parent=1 // pred_check
      _
    $region23: #{tpu_custom_call.1} parent=1 // pred_check_branch
      %359 = sbr.rel (0) target = $region25
    $region24: #{tpu_custom_call.1} parent=1 // pred_region
      %360 = dma.done [#allocation4], 1024
    $region25: #{tpu_custom_call.1} parent=1 // pred_fallthru
      _
    %361 = vsyncpa [#allocation3], 1
    %362 = vsyncpa [#allocation6], 1
    %363 = vsyncpa [#allocation4], 1

</llo_original>
